<compile_context>
chip_gen: v7x
topology: tpu7x:2x2x1
jax: 0.10.0
libtpu: 0.0.40
codegen_flags: <defaults>
</compile_context>

<pallas_src>
import math

import jax
import jax.numpy as jnp
from jax.experimental import pallas as pl
from jax.experimental.pallas import tpu as pltpu

_DROPOUT_P = 0.1
_BN_EPS = 1e-5


# ----------------------------------------------------------------------------
# Fused kernel: the entire Encoder2 forward in one pallas_call.
# ----------------------------------------------------------------------------
def encoder_kernel(x_ref, *refs):
    """refs = (w_0, ..., w_{L-1}, gamma_beta, dropout_masks, out)."""
    n_layers = len(refs) - 3
    w_refs = refs[:n_layers]
    gb_ref, mask_ref, o_ref = refs[n_layers:]

    h = x_ref[...]                                    # [B, D0], f32
    batch = h.shape[0]

    for l, w_ref in enumerate(w_refs):
        w = w_ref[...]                                # [D_in, D_out]
        d_out = w.shape[1]

        # Linear.  Bias intentionally omitted: train-mode BatchNorm subtracts
        # the per-feature batch mean, which cancels a bias exactly.
        y = jnp.dot(h.astype(jnp.bfloat16), w.astype(jnp.bfloat16),
                    preferred_element_type=jnp.float32)

        # BatchNorm1d, training mode: biased batch stats, one-pass variance.
        mean = jnp.mean(y, axis=0, keepdims=True)
        var = jnp.maximum(
            jnp.mean(y * y, axis=0, keepdims=True) - mean * mean, 0.0)
        gamma = gb_ref[2 * l:2 * l + 1, :d_out]       # [1, D_out]
        beta = gb_ref[2 * l + 1:2 * l + 2, :d_out]    # [1, D_out]
        z = gamma * (y - mean) * jax.lax.rsqrt(var + _BN_EPS) + beta

        # ReLU.
        z = jnp.maximum(z, 0.0)

        # Dropout (train): mask entries are already 0 or 1/(1-p).
        h = z * mask_ref[l * batch:(l + 1) * batch, :d_out]

    o_ref[...] = h


def encoder2_forward(x, weights, gamma_beta, dropout_masks):
    """x: [B, D0]; weights: tuple of [D_in, D_out]; returns [B, D_last]."""
    batch = x.shape[0]
    d_last = weights[-1].shape[1]
    n_in = 1 + len(weights) + 2
    return pl.pallas_call(
        encoder_kernel,
        out_shape=jax.ShapeDtypeStruct((batch, d_last), jnp.float32),
        in_specs=[pl.BlockSpec(memory_space=pltpu.MemorySpace.VMEM)
                  for _ in range(n_in)],
        out_specs=pl.BlockSpec(memory_space=pltpu.MemorySpace.VMEM),
    )(x, *weights, gamma_beta, dropout_masks)


# ----------------------------------------------------------------------------
# Host-side parameter / mask packing (plain JAX).
# ----------------------------------------------------------------------------
def init_params(key, input_dim, channels):
    """nn.Linear-style weight init; gamma=1 / beta=0 packed into one slab."""
    dims = [input_dim] + list(channels)
    d_max = max(channels)
    weights = []
    gb = jnp.zeros((2 * len(channels), d_max), jnp.float32)
    for i in range(len(channels)):
        key, k_w = jax.random.split(key)
        bound = 1.0 / math.sqrt(dims[i])
        w = jax.random.uniform(
            k_w, (dims[i], dims[i + 1]), jnp.float32, -bound, bound)
        weights.append(w)
        gb = gb.at[2 * i, :dims[i + 1]].set(1.0)   # gamma row; beta row stays 0
    return tuple(weights), gb


def make_dropout_masks(key, batch, channels, p=_DROPOUT_P):
    """Inverted-dropout keep masks, packed into one [L*B, Dmax] slab."""
    d_max = max(channels)
    slab = jnp.zeros((len(channels) * batch, d_max), jnp.float32)
    scale = 1.0 / (1.0 - p)
    for i, d in enumerate(channels):
        key, sub = jax.random.split(key)
        keep = jax.random.bernoulli(sub, 1.0 - p, (batch, d))
        slab = slab.at[i * batch:(i + 1) * batch, :d].set(
            keep.astype(jnp.float32) * scale)
    return slab


if __name__ == "__main__":
    # Small shapes consistent with the module (scaled down from
    # input_dim=4000, channels=[200, 50, 20]).
    B = 8
    input_dim = 64
    channels = [32, 16, 8]

    key = jax.random.PRNGKey(0)
    k_params, k_x, k_drop = jax.random.split(key, 3)

    weights, gamma_beta = init_params(k_params, input_dim, channels)
    x = jax.random.normal(k_x, (B, input_dim), jnp.float32)
    masks = make_dropout_masks(k_drop, B, channels)

    z = encoder2_forward(x, weights, gamma_beta, masks)
    jax.block_until_ready(z)

    assert z.shape == (B, channels[-1])
    assert bool(jnp.all(jnp.isfinite(z)))
    assert bool(jnp.all(z >= 0.0))  # post-ReLU/Dropout output is non-negative

    print("KERNEL_OK")
</pallas_src>

<mosaic_0001>
module attributes {stable_mosaic.version = 11 : i64} {
  func.func @encoder_kernel(%arg0: memref<8x64xf32, #tpu.memory_space<vmem>>, %arg1: memref<64x32xf32, #tpu.memory_space<vmem>>, %arg2: memref<32x16xf32, #tpu.memory_space<vmem>>, %arg3: memref<16x8xf32, #tpu.memory_space<vmem>>, %arg4: memref<6x32xf32, #tpu.memory_space<vmem>>, %arg5: memref<24x32xf32, #tpu.memory_space<vmem>>, %arg6: memref<8x8xf32, #tpu.memory_space<vmem>>) attributes {dimension_semantics = [], scalar_prefetch = 0 : i64, scratch_operands = 0 : i64, tpu.core_type = #tpu.core_type<tc>} {
    %c0 = arith.constant 0 : index
    %c0_0 = arith.constant 0 : index
    %0 = vector.load %arg0[%c0, %c0_0] : memref<8x64xf32, #tpu.memory_space<vmem>>, vector<8x64xf32>
    %c0_1 = arith.constant 0 : index
    %c0_2 = arith.constant 0 : index
    %1 = vector.load %arg1[%c0_1, %c0_2] : memref<64x32xf32, #tpu.memory_space<vmem>>, vector<64x32xf32>
    %2 = arith.truncf %0 : vector<8x64xf32> to vector<8x64xbf16>
    %3 = arith.truncf %1 : vector<64x32xf32> to vector<64x32xbf16>
    %cst = arith.constant dense<0.000000e+00> : vector<8x32xf32>
    %4 = tpu.matmul %2, %3, %cst {dimension_numbers = #tpu.dot_dimension_numbers<[1], [0], [0], [1], [0, 0, 1, 1], [], []>} : vector<8x64xbf16>, vector<64x32xbf16>, vector<8x32xf32> -> vector<8x32xf32>
    %cst_3 = arith.constant dense<0.000000e+00> : vector<32xf32>
    %5 = vector.multi_reduction <add>, %4, %cst_3 [0] : vector<8x32xf32> to vector<32xf32>
    %6 = vector.shape_cast %5 : vector<32xf32> to vector<1x32xf32>
    %cst_4 = arith.constant 8.000000e+00 : f32
    %7 = vector.broadcast %cst_4 : f32 to vector<1x32xf32>
    %8 = arith.divf %6, %7 : vector<1x32xf32>
    %9 = arith.mulf %4, %4 : vector<8x32xf32>
    %cst_5 = arith.constant dense<0.000000e+00> : vector<32xf32>
    %10 = vector.multi_reduction <add>, %9, %cst_5 [0] : vector<8x32xf32> to vector<32xf32>
    %11 = vector.shape_cast %10 : vector<32xf32> to vector<1x32xf32>
    %cst_6 = arith.constant 8.000000e+00 : f32
    %12 = vector.broadcast %cst_6 : f32 to vector<1x32xf32>
    %13 = arith.divf %11, %12 : vector<1x32xf32>
    %14 = arith.mulf %8, %8 : vector<1x32xf32>
    %15 = arith.subf %13, %14 : vector<1x32xf32>
    %cst_7 = arith.constant 0.000000e+00 : f32
    %16 = vector.broadcast %cst_7 : f32 to vector<1x32xf32>
    %17 = arith.maximumf %15, %16 : vector<1x32xf32>
    %c0_8 = arith.constant 0 : index
    %c0_9 = arith.constant 0 : index
    %18 = vector.load %arg4[%c0_8, %c0_9] : memref<6x32xf32, #tpu.memory_space<vmem>>, vector<1x32xf32>
    %c1 = arith.constant 1 : index
    %c0_10 = arith.constant 0 : index
    %19 = vector.load %arg4[%c1, %c0_10] : memref<6x32xf32, #tpu.memory_space<vmem>>, vector<1x32xf32>
    %20 = vector.broadcast %8 : vector<1x32xf32> to vector<8x32xf32>
    %21 = arith.subf %4, %20 : vector<8x32xf32>
    %22 = vector.broadcast %18 : vector<1x32xf32> to vector<8x32xf32>
    %23 = arith.mulf %22, %21 : vector<8x32xf32>
    %cst_11 = arith.constant 9.99999974E-6 : f32
    %24 = vector.broadcast %cst_11 : f32 to vector<1x32xf32>
    %25 = arith.addf %17, %24 : vector<1x32xf32>
    %26 = math.rsqrt %25 : vector<1x32xf32>
    %27 = vector.broadcast %26 : vector<1x32xf32> to vector<8x32xf32>
    %28 = arith.mulf %23, %27 : vector<8x32xf32>
    %29 = vector.broadcast %19 : vector<1x32xf32> to vector<8x32xf32>
    %30 = arith.addf %28, %29 : vector<8x32xf32>
    %cst_12 = arith.constant 0.000000e+00 : f32
    %31 = vector.broadcast %cst_12 : f32 to vector<8x32xf32>
    %32 = arith.maximumf %30, %31 : vector<8x32xf32>
    %c0_13 = arith.constant 0 : index
    %c0_14 = arith.constant 0 : index
    %33 = vector.load %arg5[%c0_13, %c0_14] : memref<24x32xf32, #tpu.memory_space<vmem>>, vector<8x32xf32>
    %34 = arith.mulf %32, %33 : vector<8x32xf32>
    %c0_15 = arith.constant 0 : index
    %c0_16 = arith.constant 0 : index
    %35 = vector.load %arg2[%c0_15, %c0_16] : memref<32x16xf32, #tpu.memory_space<vmem>>, vector<32x16xf32>
    %36 = arith.truncf %34 : vector<8x32xf32> to vector<8x32xbf16>
    %37 = arith.truncf %35 : vector<32x16xf32> to vector<32x16xbf16>
    %cst_17 = arith.constant dense<0.000000e+00> : vector<8x16xf32>
    %38 = tpu.matmul %36, %37, %cst_17 {dimension_numbers = #tpu.dot_dimension_numbers<[1], [0], [0], [1], [0, 0, 1, 1], [], []>} : vector<8x32xbf16>, vector<32x16xbf16>, vector<8x16xf32> -> vector<8x16xf32>
    %cst_18 = arith.constant dense<0.000000e+00> : vector<16xf32>
    %39 = vector.multi_reduction <add>, %38, %cst_18 [0] : vector<8x16xf32> to vector<16xf32>
    %40 = vector.shape_cast %39 : vector<16xf32> to vector<1x16xf32>
    %cst_19 = arith.constant 8.000000e+00 : f32
    %41 = vector.broadcast %cst_19 : f32 to vector<1x16xf32>
    %42 = arith.divf %40, %41 : vector<1x16xf32>
    %43 = arith.mulf %38, %38 : vector<8x16xf32>
    %cst_20 = arith.constant dense<0.000000e+00> : vector<16xf32>
    %44 = vector.multi_reduction <add>, %43, %cst_20 [0] : vector<8x16xf32> to vector<16xf32>
    %45 = vector.shape_cast %44 : vector<16xf32> to vector<1x16xf32>
    %cst_21 = arith.constant 8.000000e+00 : f32
    %46 = vector.broadcast %cst_21 : f32 to vector<1x16xf32>
    %47 = arith.divf %45, %46 : vector<1x16xf32>
    %48 = arith.mulf %42, %42 : vector<1x16xf32>
    %49 = arith.subf %47, %48 : vector<1x16xf32>
    %cst_22 = arith.constant 0.000000e+00 : f32
    %50 = vector.broadcast %cst_22 : f32 to vector<1x16xf32>
    %51 = arith.maximumf %49, %50 : vector<1x16xf32>
    %c2 = arith.constant 2 : index
    %c0_23 = arith.constant 0 : index
    %52 = vector.load %arg4[%c2, %c0_23] : memref<6x32xf32, #tpu.memory_space<vmem>>, vector<1x16xf32>
    %c3 = arith.constant 3 : index
    %c0_24 = arith.constant 0 : index
    %53 = vector.load %arg4[%c3, %c0_24] : memref<6x32xf32, #tpu.memory_space<vmem>>, vector<1x16xf32>
    %54 = vector.broadcast %42 : vector<1x16xf32> to vector<8x16xf32>
    %55 = arith.subf %38, %54 : vector<8x16xf32>
    %56 = vector.broadcast %52 : vector<1x16xf32> to vector<8x16xf32>
    %57 = arith.mulf %56, %55 : vector<8x16xf32>
    %cst_25 = arith.constant 9.99999974E-6 : f32
    %58 = vector.broadcast %cst_25 : f32 to vector<1x16xf32>
    %59 = arith.addf %51, %58 : vector<1x16xf32>
    %60 = math.rsqrt %59 : vector<1x16xf32>
    %61 = vector.broadcast %60 : vector<1x16xf32> to vector<8x16xf32>
    %62 = arith.mulf %57, %61 : vector<8x16xf32>
    %63 = vector.broadcast %53 : vector<1x16xf32> to vector<8x16xf32>
    %64 = arith.addf %62, %63 : vector<8x16xf32>
    %cst_26 = arith.constant 0.000000e+00 : f32
    %65 = vector.broadcast %cst_26 : f32 to vector<8x16xf32>
    %66 = arith.maximumf %64, %65 : vector<8x16xf32>
    %c8 = arith.constant 8 : index
    %c0_27 = arith.constant 0 : index
    %67 = vector.load %arg5[%c8, %c0_27] : memref<24x32xf32, #tpu.memory_space<vmem>>, vector<8x16xf32>
    %68 = arith.mulf %66, %67 : vector<8x16xf32>
    %c0_28 = arith.constant 0 : index
    %c0_29 = arith.constant 0 : index
    %69 = vector.load %arg3[%c0_28, %c0_29] : memref<16x8xf32, #tpu.memory_space<vmem>>, vector<16x8xf32>
    %70 = arith.truncf %68 : vector<8x16xf32> to vector<8x16xbf16>
    %71 = arith.truncf %69 : vector<16x8xf32> to vector<16x8xbf16>
    %cst_30 = arith.constant dense<0.000000e+00> : vector<8x8xf32>
    %72 = tpu.matmul %70, %71, %cst_30 {dimension_numbers = #tpu.dot_dimension_numbers<[1], [0], [0], [1], [0, 0, 1, 1], [], []>} : vector<8x16xbf16>, vector<16x8xbf16>, vector<8x8xf32> -> vector<8x8xf32>
    %cst_31 = arith.constant dense<0.000000e+00> : vector<8xf32>
    %73 = vector.multi_reduction <add>, %72, %cst_31 [0] : vector<8x8xf32> to vector<8xf32>
    %74 = vector.shape_cast %73 : vector<8xf32> to vector<1x8xf32>
    %cst_32 = arith.constant 8.000000e+00 : f32
    %75 = vector.broadcast %cst_32 : f32 to vector<1x8xf32>
    %76 = arith.divf %74, %75 : vector<1x8xf32>
    %77 = arith.mulf %72, %72 : vector<8x8xf32>
    %cst_33 = arith.constant dense<0.000000e+00> : vector<8xf32>
    %78 = vector.multi_reduction <add>, %77, %cst_33 [0] : vector<8x8xf32> to vector<8xf32>
    %79 = vector.shape_cast %78 : vector<8xf32> to vector<1x8xf32>
    %cst_34 = arith.constant 8.000000e+00 : f32
    %80 = vector.broadcast %cst_34 : f32 to vector<1x8xf32>
    %81 = arith.divf %79, %80 : vector<1x8xf32>
    %82 = arith.mulf %76, %76 : vector<1x8xf32>
    %83 = arith.subf %81, %82 : vector<1x8xf32>
    %cst_35 = arith.constant 0.000000e+00 : f32
    %84 = vector.broadcast %cst_35 : f32 to vector<1x8xf32>
    %85 = arith.maximumf %83, %84 : vector<1x8xf32>
    %c4 = arith.constant 4 : index
    %c0_36 = arith.constant 0 : index
    %86 = vector.load %arg4[%c4, %c0_36] : memref<6x32xf32, #tpu.memory_space<vmem>>, vector<1x8xf32>
    %c5 = arith.constant 5 : index
    %c0_37 = arith.constant 0 : index
    %87 = vector.load %arg4[%c5, %c0_37] : memref<6x32xf32, #tpu.memory_space<vmem>>, vector<1x8xf32>
    %88 = vector.broadcast %76 : vector<1x8xf32> to vector<8x8xf32>
    %89 = arith.subf %72, %88 : vector<8x8xf32>
    %90 = vector.broadcast %86 : vector<1x8xf32> to vector<8x8xf32>
    %91 = arith.mulf %90, %89 : vector<8x8xf32>
    %cst_38 = arith.constant 9.99999974E-6 : f32
    %92 = vector.broadcast %cst_38 : f32 to vector<1x8xf32>
    %93 = arith.addf %85, %92 : vector<1x8xf32>
    %94 = math.rsqrt %93 : vector<1x8xf32>
    %95 = vector.broadcast %94 : vector<1x8xf32> to vector<8x8xf32>
    %96 = arith.mulf %91, %95 : vector<8x8xf32>
    %97 = vector.broadcast %87 : vector<1x8xf32> to vector<8x8xf32>
    %98 = arith.addf %96, %97 : vector<8x8xf32>
    %cst_39 = arith.constant 0.000000e+00 : f32
    %99 = vector.broadcast %cst_39 : f32 to vector<8x8xf32>
    %100 = arith.maximumf %98, %99 : vector<8x8xf32>
    %c16 = arith.constant 16 : index
    %c0_40 = arith.constant 0 : index
    %101 = vector.load %arg5[%c16, %c0_40] : memref<24x32xf32, #tpu.memory_space<vmem>>, vector<8x8xf32>
    %102 = arith.mulf %100, %101 : vector<8x8xf32>
    %c0_41 = arith.constant 0 : index
    %c0_42 = arith.constant 0 : index
    %103 = vector.load %arg6[%c0_41, %c0_42] : memref<8x8xf32, #tpu.memory_space<vmem>>, vector<8x8xf32>
    tpu.vector_store %arg6[%c0_41, %c0_42], %102 {strides = array<i32>} : memref<8x8xf32, #tpu.memory_space<vmem>>, vector<8x8xf32>,
    return
  }
}

</mosaic_0001>

<llo_original>
// kernel: tpu_custom_call.1
$region0: #{tpu_custom_call.1}
  #allocation0 [shape = 'u32[]', space=smem, size = 0x4, offset = 0x4, fixed_abs, tag = 'smem constant byte address 0x4 - core index']
  #allocation1 [shape = 'u32[144,128]{1,0:T(1,128)}', space=vmem, size = 0x12000, scoped, tag = 'internal scratch']
  %s0 = inlined_call_operand.vmem [shape: f32[8,64], index: 0, kind: input, shape index: {}]
  %s1 = inlined_call_operand.vmem [shape: f32[64,32], index: 1, kind: input, shape index: {}]
  %s2 = inlined_call_operand.vmem [shape: f32[32,16], index: 2, kind: input, shape index: {}]
  %s3 = inlined_call_operand.vmem [shape: f32[16,8], index: 3, kind: input, shape index: {}]
  %s4 = inlined_call_operand.vmem [shape: f32[6,32], index: 4, kind: input, shape index: {}]
  %s5 = inlined_call_operand.vmem [shape: f32[24,32], index: 5, kind: input, shape index: {}]
  %s6 = inlined_call_operand.hbm [shape: f32[8,8], index: 6, kind: output, shape index: {}]
  %s7 = sld [smem:[#allocation0]]
  $region34: #{tpu_custom_call.1} parent=0
    _
  %s9 = ssub.s32 1, %s7
  %s10 = scalar_select 0, %s9, %s7
  $region1: #{tpu_custom_call.1} parent=0
    #allocation2 [shape = 'u8[4096]{0}', space=vmem, size = 0x1000, scoped, tag = 'output window, operand 0, single buffered']
    #allocation3 [shape = 's32[1]{0}', space=sflag, size = 0x4, scoped, tag = 'scoped memory for tpu_custom_call.1']
    %11 = vsyncpa [#allocation3], 0
    // Predicated region
    $region2: #{tpu_custom_call.1} parent=1 // pred_check
      _
    $region3: #{tpu_custom_call.1} parent=1 // pred_check_branch
      %13 = sbr.rel (0) target = $region5
    $region4: #{tpu_custom_call.1} parent=1 // pred_region
      _
    $region5: #{tpu_custom_call.1} parent=1 // pred_fallthru
      _
    // Predicated region
    $region6: #{tpu_custom_call.1} parent=1 // pred_check
      _
    $region7: #{tpu_custom_call.1} parent=1 // pred_check_branch
      %15 = sbr.rel (0) target = $region9
    $region8: #{tpu_custom_call.1} parent=1 // pred_region
      _
    $region9: #{tpu_custom_call.1} parent=1 // pred_fallthru
      _
    // Predicated region
    $region10: #{tpu_custom_call.1} parent=1 // pred_check
      _
    $region11: #{tpu_custom_call.1} parent=1 // pred_check_branch
      %17 = sbr.rel (0) target = $region13
    $region12: #{tpu_custom_call.1} parent=1 // pred_region
      _
    $region13: #{tpu_custom_call.1} parent=1 // pred_fallthru
      _
    // Predicated region
    $region14: #{tpu_custom_call.1} parent=1 // pred_check
      _
    $region15: #{tpu_custom_call.1} parent=1 // pred_check_branch
      %19 = sbr.rel (0) target = $region17
    $region16: #{tpu_custom_call.1} parent=1 // pred_region
      _
    $region17: #{tpu_custom_call.1} parent=1 // pred_fallthru
      _
    // Predicated region
    $region18: #{tpu_custom_call.1} parent=1 // pred_check
      _
    $region19: #{tpu_custom_call.1} parent=1 // pred_check_branch
      %21 = sbr.rel (0) target = $region21
    $region20: #{tpu_custom_call.1} parent=1 // pred_region
      _
    $region21: #{tpu_custom_call.1} parent=1 // pred_fallthru
      _
    // Predicated region
    $region22: #{tpu_custom_call.1} parent=1 // pred_check
      _
    $region23: #{tpu_custom_call.1} parent=1 // pred_check_branch
      %23 = sbr.rel (0) target = $region25
    $region24: #{tpu_custom_call.1} parent=1 // pred_region
      _
    $region25: #{tpu_custom_call.1} parent=1 // pred_fallthru
      _
    %v25 = vld [vmem:[%s0] sm:$0xff]
    %v26 = vld [vmem:[%s1] sm:$0xff]
    %v27 = vld [vmem:[%s1 + $0x8] sm:$0xff]
    %v28 = vld [vmem:[%s1 + $0x10] sm:$0xff]
    %v29 = vld [vmem:[%s1 + $0x18] sm:$0xff]
    %v30 = vld [vmem:[%s1 + $0x20] sm:$0xff]
    %v31 = vld [vmem:[%s1 + $0x28] sm:$0xff]
    %v32 = vld [vmem:[%s1 + $0x30] sm:$0xff]
    %v33 = vld [vmem:[%s1 + $0x38] sm:$0xff]
    %v34 = vpack.c.bf16 %v25, %v25
    %v35 = vpack.c.bf16 %v27, %v26
    %v36 = vpack.c.bf16 %v29, %v28
    %v37 = vpack.c.bf16 %v31, %v30
    %v38 = vpack.c.bf16 %v33, %v32
    %vm39 = vcmask 523264
    %v41 = vsel %vm39, %v34, 0
    %43 = vmatprep.subr.bf16.mxu0 0
    %44 = vmatpush1.bf16.msra.mxu0 %v35
    %45 = vmatprep.subr.bf16.mxu0 0
    %46 = vmatpush1.bf16.msra.mxu0 %v36
    %47 = vmatprep.subr.bf16.mxu0 0
    %48 = vmatpush1.bf16.msra.mxu0 %v37
    %49 = vmatprep.subr.bf16.mxu0 0
    %50 = vmatpush1.bf16.msra.mxu0 %v38
    %51 = vmatprep.subr.bf16.mxu0 0
    %52 = vmatpush1.bf16.msra.mxu0 0
    %53 = vmatprep.subr.bf16.mxu0 0
    %54 = vmatpush1.bf16.msra.mxu0 0
    %55 = vmatprep.subr.bf16.mxu0 0
    %56 = vmatpush1.bf16.msra.mxu0 0
    %57 = vmatprep.subr.bf16.mxu0 0
    %58 = vmatpush1.bf16.msra.mxu0 0
    %59 = vmatprep.subr.bf16.mxu0 0
    %60 = vmatpush1.bf16.msra.mxu0 0
    %61 = vmatprep.subr.bf16.mxu0 0
    %62 = vmatpush1.bf16.msra.mxu0 0
    %63 = vmatprep.subr.bf16.mxu0 0
    %64 = vmatpush1.bf16.msra.mxu0 0
    %65 = vmatprep.subr.bf16.mxu0 0
    %66 = vmatpush1.bf16.msra.mxu0 0
    %67 = vmatprep.subr.bf16.mxu0 0
    %68 = vmatpush1.bf16.msra.mxu0 0
    %69 = vmatprep.subr.bf16.mxu0 0
    %70 = vmatpush1.bf16.msra.mxu0 0
    %71 = vmatprep.subr.bf16.mxu0 0
    %72 = vmatpush1.bf16.msra.mxu0 0
    %73 = vmatprep.subr.bf16.mxu0 0
    %74 = vmatpush1.bf16.msra.mxu0 0
    %75 = vmatprep.mubr.bf16.mxu0 0
    %76 = vmatmul.mubr.bf16.gmra.mrb[0].mxu0 %v41
    %v77 = vpop.f32.mrb[0].mxu0
    %v78 = vadd.f32 0.0, %v77
    %v79 = vpop.f32.mrb[0].mxu0
    %v80 = vpop.f32.mrb[0].mxu0
    %v81 = vpop.f32.mrb[0].mxu0
    %82 = vdwg.mxu0
    %vm83 = vcmask 261120
    %v84 = vsel %vm83, %v78, 0.0
    %v85 = vrot.slane %v84, 4
    %v86 = vadd.f32 %v84, %v85
    %v87 = vrot.slane %v86, 2
    %v88 = vadd.f32 %v86, %v87
    %v89 = vrot.slane %v88, 1
    %v90 = vadd.f32 %v88, %v89
    %v91 = vrcp.pop 8.0
    %v92 = vmul.f32 %v90, %v91
    %v93 = vmul.f32 %v78, %v78
    %v94 = vsel %vm83, %v93, 0.0
    %v95 = vrot.slane %v94, 4
    %v96 = vadd.f32 %v94, %v95
    %v97 = vrot.slane %v96, 2
    %v98 = vadd.f32 %v96, %v97
    %v99 = vrot.slane %v98, 1
    %v100 = vadd.f32 %v98, %v99
    %v101 = vmul.f32 %v100, %v91
    %v102 = vmul.f32 %v92, %v92
    %v103 = vsub.f32 %v101, %v102
    %v104 = vmax.f32 %v103, 0.0
    %v105 = vld [vmem:[%s4] sm:$0x1]
    %v106 = vld [vmem:[%s4 + $0x1] sm:$0x1]
    %v107 = vsub.f32 %v78, %v92
    %v108 = vlaneseq
    %v109 = vshrl.u32 %v108, 7
    %v110 = vsub.s32 0, %v109
    %v111 = vrot.slane %v105, %v110
    %v112 = vmul.f32 %v111, %v107
    %v113 = vadd.f32 %v104, 1e-05
    %v114 = vrsqrt.pop %v113
    %v115 = vmul.f32 %v112, %v114
    %v116 = vlaneseq
    %v117 = vshrl.u32 %v116, 7
    %v118 = vsub.s32 0, %v117
    %v119 = vrot.slane %v106, %v118
    %v120 = vadd.f32 %v115, %v119
    %v121 = vmax.f32 %v120, 0.0
    %v122 = vld [vmem:[%s5] sm:$0xff]
    %v123 = vmul.f32 %v121, %v122
    %v124 = vld [vmem:[%s2] sm:$0xff]
    %v125 = vld [vmem:[%s2 + $0x8] sm:$0xff]
    %v126 = vld [vmem:[%s2 + $0x10] sm:$0xff]
    %v127 = vld [vmem:[%s2 + $0x18] sm:$0xff]
    %v128 = vpack.c.bf16 %v123, %v123
    %v129 = vpack.c.bf16 %v125, %v124
    %v130 = vpack.c.bf16 %v127, %v126
    %v132 = vsel %vm83, %v128, 0
    %134 = vmatprep.subr.bf16.mxu0 0
    %135 = vmatpush1.bf16.msra.mxu0 %v129
    %136 = vmatprep.subr.bf16.mxu0 0
    %137 = vmatpush1.bf16.msra.mxu0 %v130
    %138 = vmatprep.subr.bf16.mxu0 0
    %139 = vmatpush1.bf16.msra.mxu0 0
    %140 = vmatprep.subr.bf16.mxu0 0
    %141 = vmatpush1.bf16.msra.mxu0 0
    %142 = vmatprep.subr.bf16.mxu0 0
    %143 = vmatpush1.bf16.msra.mxu0 0
    %144 = vmatprep.subr.bf16.mxu0 0
    %145 = vmatpush1.bf16.msra.mxu0 0
    %146 = vmatprep.subr.bf16.mxu0 0
    %147 = vmatpush1.bf16.msra.mxu0 0
    %148 = vmatprep.subr.bf16.mxu0 0
    %149 = vmatpush1.bf16.msra.mxu0 0
    %150 = vmatprep.subr.bf16.mxu0 0
    %151 = vmatpush1.bf16.msra.mxu0 0
    %152 = vmatprep.subr.bf16.mxu0 0
    %153 = vmatpush1.bf16.msra.mxu0 0
    %154 = vmatprep.subr.bf16.mxu0 0
    %155 = vmatpush1.bf16.msra.mxu0 0
    %156 = vmatprep.subr.bf16.mxu0 0
    %157 = vmatpush1.bf16.msra.mxu0 0
    %158 = vmatprep.subr.bf16.mxu0 0
    %159 = vmatpush1.bf16.msra.mxu0 0
    %160 = vmatprep.subr.bf16.mxu0 0
    %161 = vmatpush1.bf16.msra.mxu0 0
    %162 = vmatprep.subr.bf16.mxu0 0
    %163 = vmatpush1.bf16.msra.mxu0 0
    %164 = vmatprep.subr.bf16.mxu0 0
    %165 = vmatpush1.bf16.msra.mxu0 0
    %166 = vmatprep.mubr.bf16.mxu0 0
    %167 = vmatmul.mubr.bf16.gmra.mrb[0].mxu0 %v132
    %v168 = vpop.f32.mrb[0].mxu0
    %v169 = vadd.f32 0.0, %v168
    %v170 = vpop.f32.mrb[0].mxu0
    %v171 = vpop.f32.mrb[0].mxu0
    %v172 = vpop.f32.mrb[0].mxu0
    %173 = vdwg.mxu0
    %vm174 = vcmask 130048
    %v175 = vsel %vm174, %v169, 0.0
    %v176 = vrot.slane %v175, 4
    %v177 = vadd.f32 %v175, %v176
    %v178 = vrot.slane %v177, 2
    %v179 = vadd.f32 %v177, %v178
    %v180 = vrot.slane %v179, 1
    %v181 = vadd.f32 %v179, %v180
    %v182 = vmul.f32 %v181, %v91
    %v183 = vmul.f32 %v169, %v169
    %v184 = vsel %vm174, %v183, 0.0
    %v185 = vrot.slane %v184, 4
    %v186 = vadd.f32 %v184, %v185
    %v187 = vrot.slane %v186, 2
    %v188 = vadd.f32 %v186, %v187
    %v189 = vrot.slane %v188, 1
    %v190 = vadd.f32 %v188, %v189
    %v191 = vmul.f32 %v190, %v91
    %v192 = vmul.f32 %v182, %v182
    %v193 = vsub.f32 %v191, %v192
    %v194 = vmax.f32 %v193, 0.0
    %v195 = vld [vmem:[%s4 + $0x2] sm:$0x1]
    %v196 = vld [vmem:[%s4 + $0x3] sm:$0x1]
    %v197 = vsub.f32 %v169, %v182
    %v198 = vlaneseq
    %v199 = vshrl.u32 %v198, 7
    %v200 = vsub.s32 0, %v199
    %v201 = vrot.slane %v195, %v200
    %v202 = vmul.f32 %v201, %v197
    %v203 = vadd.f32 %v194, 1e-05
    %v204 = vrsqrt.pop %v203
    %v205 = vmul.f32 %v202, %v204
    %v206 = vlaneseq
    %v207 = vshrl.u32 %v206, 7
    %v208 = vsub.s32 0, %v207
    %v209 = vrot.slane %v196, %v208
    %v210 = vadd.f32 %v205, %v209
    %v211 = vmax.f32 %v210, 0.0
    %v212 = vld [vmem:[%s5 + $0x8] sm:$0xff]
    %v213 = vmul.f32 %v211, %v212
    %v214 = vld [vmem:[%s3] sm:$0xff]
    %v215 = vld [vmem:[%s3 + $0x8] sm:$0xff]
    %v216 = vpack.c.bf16 %v213, %v213
    %v217 = vpack.c.bf16 %v215, %v214
    %v219 = vsel %vm174, %v216, 0
    %221 = vmatprep.subr.bf16.mxu0 0
    %222 = vmatpush1.bf16.msra.mxu0 %v217
    %223 = vmatprep.subr.bf16.mxu0 0
    %224 = vmatpush1.bf16.msra.mxu0 0
    %225 = vmatprep.subr.bf16.mxu0 0
    %226 = vmatpush1.bf16.msra.mxu0 0
    %227 = vmatprep.subr.bf16.mxu0 0
    %228 = vmatpush1.bf16.msra.mxu0 0
    %229 = vmatprep.subr.bf16.mxu0 0
    %230 = vmatpush1.bf16.msra.mxu0 0
    %231 = vmatprep.subr.bf16.mxu0 0
    %232 = vmatpush1.bf16.msra.mxu0 0
    %233 = vmatprep.subr.bf16.mxu0 0
    %234 = vmatpush1.bf16.msra.mxu0 0
    %235 = vmatprep.subr.bf16.mxu0 0
    %236 = vmatpush1.bf16.msra.mxu0 0
    %237 = vmatprep.subr.bf16.mxu0 0
    %238 = vmatpush1.bf16.msra.mxu0 0
    %239 = vmatprep.subr.bf16.mxu0 0
    %240 = vmatpush1.bf16.msra.mxu0 0
    %241 = vmatprep.subr.bf16.mxu0 0
    %242 = vmatpush1.bf16.msra.mxu0 0
    %243 = vmatprep.subr.bf16.mxu0 0
    %244 = vmatpush1.bf16.msra.mxu0 0
    %245 = vmatprep.subr.bf16.mxu0 0
    %246 = vmatpush1.bf16.msra.mxu0 0
    %247 = vmatprep.subr.bf16.mxu0 0
    %248 = vmatpush1.bf16.msra.mxu0 0
    %249 = vmatprep.subr.bf16.mxu0 0
    %250 = vmatpush1.bf16.msra.mxu0 0
    %251 = vmatprep.subr.bf16.mxu0 0
    %252 = vmatpush1.bf16.msra.mxu0 0
    %253 = vmatprep.mubr.bf16.mxu0 0
    %254 = vmatmul.mubr.bf16.gmra.mrb[0].mxu0 %v219
    %v255 = vpop.f32.mrb[0].mxu0
    %v256 = vadd.f32 0.0, %v255
    %v257 = vpop.f32.mrb[0].mxu0
    %v258 = vpop.f32.mrb[0].mxu0
    %v259 = vpop.f32.mrb[0].mxu0
    %260 = vdwg.mxu0
    %vm261 = vcmask 64512
    %v262 = vsel %vm261, %v256, 0.0
    %v263 = vrot.slane %v262, 4
    %v264 = vadd.f32 %v262, %v263
    %v265 = vrot.slane %v264, 2
    %v266 = vadd.f32 %v264, %v265
    %v267 = vrot.slane %v266, 1
    %v268 = vadd.f32 %v266, %v267
    %v269 = vmul.f32 %v268, %v91
    %v270 = vmul.f32 %v256, %v256
    %v271 = vsel %vm261, %v270, 0.0
    %v272 = vrot.slane %v271, 4
    %v273 = vadd.f32 %v271, %v272
    %v274 = vrot.slane %v273, 2
    %v275 = vadd.f32 %v273, %v274
    %v276 = vrot.slane %v275, 1
    %v277 = vadd.f32 %v275, %v276
    %v278 = vmul.f32 %v277, %v91
    %v279 = vmul.f32 %v269, %v269
    %v280 = vsub.f32 %v278, %v279
    %v281 = vmax.f32 %v280, 0.0
    %v282 = vld [vmem:[%s4 + $0x4] sm:$0x1]
    %v283 = vld [vmem:[%s4 + $0x5] sm:$0x1]
    %v284 = vsub.f32 %v256, %v269
    %v285 = vlaneseq
    %v286 = vshrl.u32 %v285, 7
    %v287 = vsub.s32 0, %v286
    %v288 = vrot.slane %v282, %v287
    %v289 = vmul.f32 %v288, %v284
    %v290 = vadd.f32 %v281, 1e-05
    %v291 = vrsqrt.pop %v290
    %v292 = vmul.f32 %v289, %v291
    %v293 = vlaneseq
    %v294 = vshrl.u32 %v293, 7
    %v295 = vsub.s32 0, %v294
    %v296 = vrot.slane %v283, %v295
    %v297 = vadd.f32 %v292, %v296
    %v298 = vmax.f32 %v297, 0.0
    %v299 = vld [vmem:[%s5 + $0x10] sm:$0xff]
    %v300 = vmul.f32 %v298, %v299
    %301 = vst.msk [vmem:[#allocation2] sm:$0xff] %vm261, %v300
    // Predicated region
    $region26: #{tpu_custom_call.1} parent=1 // pred_check
      _
    $region27: #{tpu_custom_call.1} parent=1 // pred_check_branch
      %303 = sbr.rel (0) target = $region29
    $region28: #{tpu_custom_call.1} parent=1 // pred_region
      %s305 = ssub.s32 128, 128
      %306 = vsyncadd [#allocation3], %s305
      %s308 = sshll.u32 [#allocation2], 4
      %s309 = int_to_ptr.vmem [resolvable:$true] %s308
      %311 = dma.vmem_to_hbm [thread:$0]  %s309, 128, %s6, [#allocation3]
    $region29: #{tpu_custom_call.1} parent=1 // pred_fallthru
      _
    // Predicated region
    $region30: #{tpu_custom_call.1} parent=1 // pred_check
      _
    $region31: #{tpu_custom_call.1} parent=1 // pred_check_branch
      %313 = sbr.rel (0) target = $region33
    $region32: #{tpu_custom_call.1} parent=1 // pred_region
      %314 = dma.done [#allocation3], 128
    $region33: #{tpu_custom_call.1} parent=1 // pred_fallthru
      _
    %315 = vsyncpa [#allocation3], 1

</llo_original>
